<compile_context>
chip_gen: v6e
topology: v6e:2x2x1
jax: 0.10.0
libtpu: 0.0.40
codegen_flags: <defaults>
</compile_context>

<pallas_src>
import functools

import jax
import jax.numpy as jnp
from jax.experimental import pallas as pl
from jax.experimental.pallas import tpu as pltpu

INPUT_SIZE = 6
HIDDEN_SIZE = 200
NUM_CLASSES = 1          # kernel below assumes a single output column
LANE = 128
DEFAULT_BLOCK_B = 512    # batch tile (multiple of 128); keep modest for v7x VMEM


def _round_up(x, m):
    return pl.cdiv(x, m) * m


def mlp_kernel(xt_ref, w1_ref, b1_ref, w2_ref, b2_ref, o_ref):
    """One batch tile of: fc2(relu(fc1(x))).

    xt_ref : (INPUT_SIZE, TB)        bf16   x^T tile, batch in lanes
    w1_ref : (HIDDEN_SIZE, INPUT_SIZE) bf16 fc1.weight (PyTorch layout)
    b1_ref : (HIDDEN_SIZE, 1)        f32    fc1.bias as a column
    w2_ref : (HIDDEN_SIZE, 1)        f32    fc2.weight^T as a column
    b2_ref : (1, 1)                  f32    fc2.bias scalar (SMEM)
    o_ref  : (1, TB)                 f32    lane-dense output row
    """
    # fc1 on the MXU: (H, IN) @ (IN, TB) -> (H, TB), f32 accumulation.
    h = jnp.dot(w1_ref[...], xt_ref[...], preferred_element_type=jnp.float32)
    # Bias (lane-broadcast) + ReLU on the VPU, in f32 (safe on v5e too).
    h = jnp.maximum(h + b1_ref[...], 0.0)
    # fc2 WITHOUT the MXU: elementwise multiply (VPU) + sublane reduce (XLU).
    out = jnp.sum(h * w2_ref[...], axis=0, keepdims=True)          # (1, TB)
    o_ref[...] = (out + b2_ref[0, 0]).astype(o_ref.dtype)


@functools.partial(jax.jit, static_argnames=("block_b",))
def net_forward(x, w1, b1, w2, b2, *, block_b=DEFAULT_BLOCK_B):
    """Forward pass of Net.

    x : (B, INPUT_SIZE) float32
    w1: (HIDDEN_SIZE, INPUT_SIZE)   -- PyTorch fc1.weight layout
    b1: (HIDDEN_SIZE,)
    w2: (NUM_CLASSES, HIDDEN_SIZE)  -- PyTorch fc2.weight layout
    b2: (NUM_CLASSES,)
    returns (B, NUM_CLASSES) float32
    """
    assert NUM_CLASSES == 1, "kernel assumes a single output column"
    B = x.shape[0]

    # Lane-aligned batch tile; pad B so every grid step is a full tile.
    tb = min(_round_up(block_b, LANE), _round_up(B, LANE))
    b_pad = _round_up(B, tb)
    grid = (b_pad // tb,)

    # Wrapper-side layout plumbing: pad, put batch on the lane axis, bf16-feed
    # the MXU operands.  Weights stay resident in VMEM across all grid steps.
    xt = jnp.pad(x, ((0, b_pad - B), (0, 0))).T.astype(jnp.bfloat16)   # (IN, Bp)
    w1_bf = w1.astype(jnp.bfloat16)                                    # (H, IN)
    b1_c = b1.reshape(HIDDEN_SIZE, 1).astype(jnp.float32)              # (H, 1)
    w2_c = w2.reshape(NUM_CLASSES, HIDDEN_SIZE).T.astype(jnp.float32)  # (H, 1)
    b2_s = b2.reshape(1, 1).astype(jnp.float32)                        # (1, 1)

    out_row = pl.pallas_call(
        mlp_kernel,
        out_shape=jax.ShapeDtypeStruct((1, b_pad), jnp.float32),
        grid=grid,
        in_specs=[
            pl.BlockSpec((INPUT_SIZE, tb), lambda i: (0, i)),          # x^T tile
            pl.BlockSpec((HIDDEN_SIZE, INPUT_SIZE), lambda i: (0, 0)),  # w1
            pl.BlockSpec((HIDDEN_SIZE, 1), lambda i: (0, 0)),           # b1
            pl.BlockSpec((HIDDEN_SIZE, 1), lambda i: (0, 0)),           # w2^T
            pl.BlockSpec(memory_space=pltpu.MemorySpace.SMEM),          # b2 scalar
        ],
        out_specs=pl.BlockSpec((1, tb), lambda i: (0, i)),
        compiler_params=pltpu.CompilerParams(
            dimension_semantics=("parallel",)),
    )(xt, w1_bf, b1_c, w2_c, b2_s)

    return out_row[0, :B].reshape(B, NUM_CLASSES)


def init_params(key):
    """nn.Linear-style U(-1/sqrt(fan_in), 1/sqrt(fan_in)), PyTorch layouts."""
    k1, k2, k3, k4 = jax.random.split(key, 4)
    bound1 = 1.0 / (INPUT_SIZE ** 0.5)
    bound2 = 1.0 / (HIDDEN_SIZE ** 0.5)
    w1 = jax.random.uniform(k1, (HIDDEN_SIZE, INPUT_SIZE), jnp.float32,
                            minval=-bound1, maxval=bound1)
    b1 = jax.random.uniform(k2, (HIDDEN_SIZE,), jnp.float32,
                            minval=-bound1, maxval=bound1)
    w2 = jax.random.uniform(k3, (NUM_CLASSES, HIDDEN_SIZE), jnp.float32,
                            minval=-bound2, maxval=bound2)
    b2 = jax.random.uniform(k4, (NUM_CLASSES,), jnp.float32,
                            minval=-bound2, maxval=bound2)
    return w1, b1, w2, b2


if __name__ == "__main__":
    key = jax.random.PRNGKey(0)
    k_params, k_x = jax.random.split(key)
    w1, b1, w2, b2 = init_params(k_params)

    B = 8
    x = jax.random.normal(k_x, (B, INPUT_SIZE), jnp.float32)

    out = net_forward(x, w1, b1, w2, b2)
    out = jax.block_until_ready(out)
    assert out.shape == (B, NUM_CLASSES)

    # Reference 1: same math with bf16-quantized matmul inputs + f32 accumulate
    # (what the kernel computes) -> tight tolerance.
    x_bf = x.astype(jnp.bfloat16).astype(jnp.float32)
    w1_bf = w1.astype(jnp.bfloat16).astype(jnp.float32)
    ref_bf = jnp.maximum(x_bf @ w1_bf.T + b1[None, :], 0.0) @ w2.T + b2[None, :]
    assert jnp.allclose(out, ref_bf, atol=1e-3, rtol=1e-3)

    # Reference 2: full-f32 PyTorch-equivalent forward -> loose tolerance
    # (bf16 input quantization error only).
    ref_f32 = jnp.maximum(x @ w1.T + b1[None, :], 0.0) @ w2.T + b2[None, :]
    assert jnp.allclose(out, ref_f32, atol=3e-2, rtol=3e-2)

    print("KERNEL_OK")
</pallas_src>

<mosaic_0001>
module attributes {stable_mosaic.version = 11 : i64} {
  func.func @mlp_kernel(%arg0: i32, %arg1: memref<6x128xbf16, #tpu.memory_space<vmem>>, %arg2: memref<200x6xbf16, #tpu.memory_space<vmem>>, %arg3: memref<200x1xf32, #tpu.memory_space<vmem>>, %arg4: memref<200x1xf32, #tpu.memory_space<vmem>>, %arg5: memref<1x1xf32, #tpu.memory_space<smem>>, %arg6: memref<1x128xf32, #tpu.memory_space<vmem>>) attributes {dimension_semantics = [#tpu.dimension_semantics<parallel>], iteration_bounds = array<i64: 1>, scalar_prefetch = 0 : i64, scratch_operands = 0 : i64, tpu.core_type = #tpu.core_type<tc>, window_params = [{transform_indices = @transform_0, window_bounds = array<i64: 6, 128>}, {pipeline_mode = #tpu.pipeline_mode<synchronous>, transform_indices = @transform_1, window_bounds = array<i64: 200, 6>}, {pipeline_mode = #tpu.pipeline_mode<synchronous>, transform_indices = @transform_2, window_bounds = array<i64: 200, 1>}, {pipeline_mode = #tpu.pipeline_mode<synchronous>, transform_indices = @transform_3, window_bounds = array<i64: 200, 1>}, {transform_indices = @transform_4, window_bounds = array<i64: 1, 1>}, {transform_indices = @transform_5, window_bounds = array<i64: 1, 128>}]} {
    %c0 = arith.constant 0 : index
    %c0_0 = arith.constant 0 : index
    %0 = vector.load %arg2[%c0, %c0_0] : memref<200x6xbf16, #tpu.memory_space<vmem>>, vector<200x6xbf16>
    %c0_1 = arith.constant 0 : index
    %c0_2 = arith.constant 0 : index
    %1 = vector.load %arg1[%c0_1, %c0_2] : memref<6x128xbf16, #tpu.memory_space<vmem>>, vector<6x128xbf16>
    %cst = arith.constant dense<0.000000e+00> : vector<200x128xf32>
    %2 = tpu.matmul %0, %1, %cst {dimension_numbers = #tpu.dot_dimension_numbers<[1], [0], [0], [1], [0, 0, 1, 1], [], []>} : vector<200x6xbf16>, vector<6x128xbf16>, vector<200x128xf32> -> vector<200x128xf32>
    %c0_3 = arith.constant 0 : index
    %c0_4 = arith.constant 0 : index
    %3 = vector.load %arg3[%c0_3, %c0_4] : memref<200x1xf32, #tpu.memory_space<vmem>>, vector<200x1xf32>
    %4 = vector.broadcast %3 : vector<200x1xf32> to vector<200x128xf32>
    %5 = arith.addf %2, %4 : vector<200x128xf32>
    %cst_5 = arith.constant 0.000000e+00 : f32
    %6 = vector.broadcast %cst_5 : f32 to vector<200x128xf32>
    %7 = arith.maximumf %5, %6 : vector<200x128xf32>
    %c0_6 = arith.constant 0 : index
    %c0_7 = arith.constant 0 : index
    %8 = vector.load %arg4[%c0_6, %c0_7] : memref<200x1xf32, #tpu.memory_space<vmem>>, vector<200x1xf32>
    %9 = vector.broadcast %8 : vector<200x1xf32> to vector<200x128xf32>
    %10 = arith.mulf %7, %9 : vector<200x128xf32>
    %cst_8 = arith.constant dense<0.000000e+00> : vector<128xf32>
    %11 = vector.multi_reduction <add>, %10, %cst_8 [0] : vector<200x128xf32> to vector<128xf32>
    %12 = vector.shape_cast %11 : vector<128xf32> to vector<1x128xf32>
    %c0_9 = arith.constant 0 : index
    %c0_10 = arith.constant 0 : index
    %13 = memref.load %arg5[%c0_9, %c0_10] : memref<1x1xf32, #tpu.memory_space<smem>>
    %14 = vector.broadcast %13 : f32 to vector<1x128xf32>
    %15 = arith.addf %12, %14 : vector<1x128xf32>
    %c0_11 = arith.constant 0 : index
    %c0_12 = arith.constant 0 : index
    %16 = vector.load %arg6[%c0_11, %c0_12] : memref<1x128xf32, #tpu.memory_space<vmem>>, vector<1x128xf32>
    tpu.vector_store %arg6[%c0_11, %c0_12], %15 {strides = array<i32>} : memref<1x128xf32, #tpu.memory_space<vmem>>, vector<1x128xf32>,
    return
  }
  func.func @transform_0(%arg0: i32) -> (i32, i32) {
    %c0_i32 = arith.constant 0 : i32
    %c0_i32_0 = arith.constant 0 : i32
    return %c0_i32, %arg0 : i32, i32
  }
  func.func @transform_1(%arg0: i32) -> (i32, i32) {
    %c0_i32 = arith.constant 0 : i32
    %c0_i32_0 = arith.constant 0 : i32
    %c0_i32_1 = arith.constant 0 : i32
    return %c0_i32, %c0_i32_0 : i32, i32
  }
  func.func @transform_2(%arg0: i32) -> (i32, i32) {
    %c0_i32 = arith.constant 0 : i32
    %c0_i32_0 = arith.constant 0 : i32
    %c0_i32_1 = arith.constant 0 : i32
    return %c0_i32, %c0_i32_0 : i32, i32
  }
  func.func @transform_3(%arg0: i32) -> (i32, i32) {
    %c0_i32 = arith.constant 0 : i32
    %c0_i32_0 = arith.constant 0 : i32
    %c0_i32_1 = arith.constant 0 : i32
    return %c0_i32, %c0_i32_0 : i32, i32
  }
  func.func @transform_4(%arg0: i32) -> (i32, i32) {
    %c0_i32 = arith.constant 0 : i32
    %c0_i32_0 = arith.constant 0 : i32
    %c0_i32_1 = arith.constant 0 : i32
    return %c0_i32, %c0_i32_0 : i32, i32
  }
  func.func @transform_5(%arg0: i32) -> (i32, i32) {
    %c0_i32 = arith.constant 0 : i32
    %c0_i32_0 = arith.constant 0 : i32
    return %c0_i32, %arg0 : i32, i32
  }
}

</mosaic_0001>

<llo_original>
// kernel: net_forward.1
$region0: #{net_forward.1}
  #allocation0 [shape = 'u32[]', space=smem, size = 0x4, offset = 0x4, fixed_abs, tag = 'smem constant byte address 0x4 - core index']
  #allocation1 [shape = 'u32[144,128]{1,0:T(1,128)}', space=vmem, size = 0x12000, scoped, tag = 'internal scratch']
  #allocation2 [shape = 'f32[1,1]{1,0:T(1,128)S(6)}', space=smem, size = 0x200, scoped, tag = 'scoped memory for net_forward.1']
  %s0 = inlined_call_operand.vmem [shape: bf16[6,128], index: 0, kind: input, shape index: {}]
  %s1 = inlined_call_operand.vmem [shape: bf16[200,6], index: 1, kind: input, shape index: {}]
  %s2 = inlined_call_operand.vmem [shape: f32[200,1], index: 2, kind: input, shape index: {}]
  %s3 = inlined_call_operand.vmem [shape: f32[200,1], index: 3, kind: input, shape index: {}]
  %s4 = inlined_call_operand.<no memory space> [shape: f32[1,1], index: 4, kind: input, shape index: {}]
  %s5 = inlined_call_operand.vmem [shape: f32[1,128], index: 5, kind: output, shape index: {}]
  %s6 = sld [smem:[#allocation0]]
  $region30: #{net_forward.1} parent=0
    _
  %s8 = ssub.s32 1, %s6
  %s9 = scalar_select 0, %s8, %s6
  %10 = sst [smem:[#allocation2]] %s4
  // Predicated region
  $region2: #{net_forward.1} parent=0 // pred_check
    _
  $region3: #{net_forward.1} parent=0 // pred_check_branch
    %12 = sbr.rel (0) target = $region5
  $region4: #{net_forward.1} parent=0 // pred_region
    _
  $region5: #{net_forward.1} parent=0 // pred_fallthru
    _
  // Predicated region
  $region6: #{net_forward.1} parent=0 // pred_check
    _
  $region7: #{net_forward.1} parent=0 // pred_check_branch
    %14 = sbr.rel (0) target = $region9
  $region8: #{net_forward.1} parent=0 // pred_region
    _
  $region9: #{net_forward.1} parent=0 // pred_fallthru
    _
  // Predicated region
  $region10: #{net_forward.1} parent=0 // pred_check
    _
  $region11: #{net_forward.1} parent=0 // pred_check_branch
    %16 = sbr.rel (0) target = $region13
  $region12: #{net_forward.1} parent=0 // pred_region
    _
  $region13: #{net_forward.1} parent=0 // pred_fallthru
    _
  // Predicated region
  $region14: #{net_forward.1} parent=0 // pred_check
    _
  $region15: #{net_forward.1} parent=0 // pred_check_branch
    %18 = sbr.rel (0) target = $region17
  $region16: #{net_forward.1} parent=0 // pred_region
    _
  $region17: #{net_forward.1} parent=0 // pred_fallthru
    _
  // Predicated region
  $region18: #{net_forward.1} parent=0 // pred_check
    _
  $region19: #{net_forward.1} parent=0 // pred_check_branch
    %20 = sbr.rel (0) target = $region21
  $region20: #{net_forward.1} parent=0 // pred_region
    _
  $region21: #{net_forward.1} parent=0 // pred_fallthru
    _
  %v22 = vld [vmem:[%s1] sm:$0xf]
  %v23 = vld [vmem:[%s1 + $0x4] sm:$0xf]
  %v24 = vld [vmem:[%s1 + $0x8] sm:$0xf]
  %v25 = vld [vmem:[%s1 + $0xc] sm:$0xf]
  %v26 = vld [vmem:[%s1 + $0x10] sm:$0xf]
  %v27 = vld [vmem:[%s1 + $0x14] sm:$0xf]
  %v28 = vld [vmem:[%s1 + $0x18] sm:$0xf]
  %v29 = vld [vmem:[%s1 + $0x1c] sm:$0xf]
  %v30 = vld [vmem:[%s1 + $0x20] sm:$0xf]
  %v31 = vld [vmem:[%s1 + $0x24] sm:$0xf]
  %v32 = vld [vmem:[%s1 + $0x28] sm:$0xf]
  %v33 = vld [vmem:[%s1 + $0x2c] sm:$0xf]
  %v34 = vld [vmem:[%s1 + $0x30] sm:$0xf]
  %v35 = vld [vmem:[%s1 + $0x34] sm:$0xf]
  %v36 = vld [vmem:[%s1 + $0x38] sm:$0xf]
  %v37 = vld [vmem:[%s1 + $0x3c] sm:$0xf]
  %v38 = vld [vmem:[%s1 + $0x40] sm:$0xf]
  %v39 = vld [vmem:[%s1 + $0x44] sm:$0xf]
  %v40 = vld [vmem:[%s1 + $0x48] sm:$0xf]
  %v41 = vld [vmem:[%s1 + $0x4c] sm:$0xf]
  %v42 = vld [vmem:[%s1 + $0x50] sm:$0xf]
  %v43 = vld [vmem:[%s1 + $0x54] sm:$0xf]
  %v44 = vld [vmem:[%s1 + $0x58] sm:$0xf]
  %v45 = vld [vmem:[%s1 + $0x5c] sm:$0xf]
  %v46 = vld [vmem:[%s1 + $0x60] sm:$0xf]
  %v47 = vld [vmem:[%s0] sm:$0x7]
  %v48 = vld [vmem:[%s2] sm:$0xff]
  %v49 = vld [vmem:[%s2 + $0x8] sm:$0xff]
  %v50 = vld [vmem:[%s2 + $0x10] sm:$0xff]
  %v51 = vld [vmem:[%s2 + $0x18] sm:$0xff]
  %v52 = vld [vmem:[%s2 + $0x20] sm:$0xff]
  %v53 = vld [vmem:[%s2 + $0x28] sm:$0xff]
  %v54 = vld [vmem:[%s2 + $0x30] sm:$0xff]
  %v55 = vld [vmem:[%s2 + $0x38] sm:$0xff]
  %v56 = vld [vmem:[%s2 + $0x40] sm:$0xff]
  %v57 = vld [vmem:[%s2 + $0x48] sm:$0xff]
  %v58 = vld [vmem:[%s2 + $0x50] sm:$0xff]
  %v59 = vld [vmem:[%s2 + $0x58] sm:$0xff]
  %v60 = vld [vmem:[%s2 + $0x60] sm:$0xff]
  %v61 = vld [vmem:[%s2 + $0x68] sm:$0xff]
  %v62 = vld [vmem:[%s2 + $0x70] sm:$0xff]
  %v63 = vld [vmem:[%s2 + $0x78] sm:$0xff]
  %v64 = vld [vmem:[%s2 + $0x80] sm:$0xff]
  %v65 = vld [vmem:[%s2 + $0x88] sm:$0xff]
  %v66 = vld [vmem:[%s2 + $0x90] sm:$0xff]
  %v67 = vld [vmem:[%s2 + $0x98] sm:$0xff]
  %v68 = vld [vmem:[%s2 + $0xa0] sm:$0xff]
  %v69 = vld [vmem:[%s2 + $0xa8] sm:$0xff]
  %v70 = vld [vmem:[%s2 + $0xb0] sm:$0xff]
  %v71 = vld [vmem:[%s2 + $0xb8] sm:$0xff]
  %v72 = vld [vmem:[%s2 + $0xc0] sm:$0xff]
  %74 = vset.pattern.permute.xlu0 0
  %75 = vperm.xlu0 %74, %v48
  %v76 = vpop.permute.xlu0 %75
  %79 = vset.pattern.permute.xlu0 0
  %80 = vperm.xlu0 %79, %v49
  %v81 = vpop.permute.xlu0 %80
  %84 = vset.pattern.permute.xlu0 0
  %85 = vperm.xlu0 %84, %v50
  %v86 = vpop.permute.xlu0 %85
  %89 = vset.pattern.permute.xlu0 0
  %90 = vperm.xlu0 %89, %v51
  %v91 = vpop.permute.xlu0 %90
  %94 = vset.pattern.permute.xlu0 0
  %95 = vperm.xlu0 %94, %v52
  %v96 = vpop.permute.xlu0 %95
  %99 = vset.pattern.permute.xlu0 0
  %100 = vperm.xlu0 %99, %v53
  %v101 = vpop.permute.xlu0 %100
  %104 = vset.pattern.permute.xlu0 0
  %105 = vperm.xlu0 %104, %v54
  %v106 = vpop.permute.xlu0 %105
  %109 = vset.pattern.permute.xlu0 0
  %110 = vperm.xlu0 %109, %v55
  %v111 = vpop.permute.xlu0 %110
  %114 = vset.pattern.permute.xlu0 0
  %115 = vperm.xlu0 %114, %v56
  %v116 = vpop.permute.xlu0 %115
  %119 = vset.pattern.permute.xlu0 0
  %120 = vperm.xlu0 %119, %v57
  %v121 = vpop.permute.xlu0 %120
  %124 = vset.pattern.permute.xlu0 0
  %125 = vperm.xlu0 %124, %v58
  %v126 = vpop.permute.xlu0 %125
  %129 = vset.pattern.permute.xlu0 0
  %130 = vperm.xlu0 %129, %v59
  %v131 = vpop.permute.xlu0 %130
  %134 = vset.pattern.permute.xlu0 0
  %135 = vperm.xlu0 %134, %v60
  %v136 = vpop.permute.xlu0 %135
  %139 = vset.pattern.permute.xlu0 0
  %140 = vperm.xlu0 %139, %v61
  %v141 = vpop.permute.xlu0 %140
  %144 = vset.pattern.permute.xlu0 0
  %145 = vperm.xlu0 %144, %v62
  %v146 = vpop.permute.xlu0 %145
  %149 = vset.pattern.permute.xlu0 0
  %150 = vperm.xlu0 %149, %v63
  %v151 = vpop.permute.xlu0 %150
  %154 = vset.pattern.permute.xlu0 0
  %155 = vperm.xlu0 %154, %v64
  %v156 = vpop.permute.xlu0 %155
  %159 = vset.pattern.permute.xlu0 0
  %160 = vperm.xlu0 %159, %v65
  %v161 = vpop.permute.xlu0 %160
  %164 = vset.pattern.permute.xlu0 0
  %165 = vperm.xlu0 %164, %v66
  %v166 = vpop.permute.xlu0 %165
  %169 = vset.pattern.permute.xlu0 0
  %170 = vperm.xlu0 %169, %v67
  %v171 = vpop.permute.xlu0 %170
  %174 = vset.pattern.permute.xlu0 0
  %175 = vperm.xlu0 %174, %v68
  %v176 = vpop.permute.xlu0 %175
  %179 = vset.pattern.permute.xlu0 0
  %180 = vperm.xlu0 %179, %v69
  %v181 = vpop.permute.xlu0 %180
  %184 = vset.pattern.permute.xlu0 0
  %185 = vperm.xlu0 %184, %v70
  %v186 = vpop.permute.xlu0 %185
  %189 = vset.pattern.permute.xlu0 0
  %190 = vperm.xlu0 %189, %v71
  %v191 = vpop.permute.xlu0 %190
  %194 = vset.pattern.permute.xlu0 0
  %195 = vperm.xlu0 %194, %v72
  %v196 = vpop.permute.xlu0 %195
  %v223 = vunpack.c.l.b16 %v22
  %v224 = vunpack.c.l.b16 %v23
  %v225 = vunpack.c.l.b16 %v24
  %v226 = vunpack.c.l.b16 %v25
  %v227 = vunpack.c.l.b16 %v26
  %v228 = vunpack.c.l.b16 %v27
  %v229 = vunpack.c.l.b16 %v28
  %v230 = vunpack.c.l.b16 %v29
  %v231 = vunpack.c.l.b16 %v30
  %v232 = vunpack.c.l.b16 %v31
  %v233 = vunpack.c.l.b16 %v32
  %v234 = vunpack.c.l.b16 %v33
  %v235 = vunpack.c.l.b16 %v34
  %v236 = vunpack.c.l.b16 %v35
  %v237 = vunpack.c.l.b16 %v36
  %v238 = vunpack.c.l.b16 %v37
  %v239 = vunpack.c.l.b16 %v38
  %v240 = vunpack.c.l.b16 %v39
  %v241 = vunpack.c.l.b16 %v40
  %v242 = vunpack.c.l.b16 %v41
  %v243 = vunpack.c.l.b16 %v42
  %v244 = vunpack.c.l.b16 %v43
  %v245 = vunpack.c.l.b16 %v44
  %v246 = vunpack.c.l.b16 %v45
  %v247 = vunpack.c.l.b16 %v46
  %v248 = vpack.c.b16 %v224, %v223
  %v249 = vpack.c.b16 %v226, %v225
  %v250 = vpack.c.b16 %v228, %v227
  %v251 = vpack.c.b16 %v230, %v229
  %v252 = vpack.c.b16 %v232, %v231
  %v253 = vpack.c.b16 %v234, %v233
  %v254 = vpack.c.b16 %v236, %v235
  %v255 = vpack.c.b16 %v238, %v237
  %v256 = vpack.c.b16 %v240, %v239
  %v257 = vpack.c.b16 %v242, %v241
  %v258 = vpack.c.b16 %v244, %v243
  %v259 = vpack.c.b16 %v246, %v245
  %v260 = vpack.c.b16 %v247, %v247
  %vm261 = vcmask 48128
  %v263 = vsel %vm261, %v248, 0
  %v266 = vsel %vm261, %v249, 0
  %v269 = vsel %vm261, %v250, 0
  %v272 = vsel %vm261, %v251, 0
  %v275 = vsel %vm261, %v252, 0
  %v278 = vsel %vm261, %v253, 0
  %v281 = vsel %vm261, %v254, 0
  %v284 = vsel %vm261, %v255, 0
  %v287 = vsel %vm261, %v256, 0
  %v290 = vsel %vm261, %v257, 0
  %v293 = vsel %vm261, %v258, 0
  %v296 = vsel %vm261, %v259, 0
  %v299 = vsel %vm261, %v260, 0
  %vm301 = vcmask 1042432
  %v303 = vsel %vm301, %v47, 0
  %305 = vmatprep.subr.bf16.mxu0 0
  %306 = vmatpush1.bf16.msra.mxu0 0
  %307 = vmatprep.subr.bf16.mxu0 0
  %308 = vmatpush1.bf16.msra.mxu0 0
  %309 = vmatprep.subr.bf16.mxu0 0
  %310 = vmatpush1.bf16.msra.mxu0 0
  %311 = vmatprep.subr.bf16.mxu0 0
  %312 = vmatpush1.bf16.msra.mxu0 0
  %313 = vmatprep.subr.bf16.mxu0 0
  %314 = vmatpush1.bf16.msra.mxu0 0
  %315 = vmatprep.subr.bf16.mxu0 0
  %316 = vmatpush1.bf16.msra.mxu0 0
  %317 = vmatprep.subr.bf16.mxu0 0
  %318 = vmatpush1.bf16.msra.mxu0 0
  %319 = vmatprep.subr.bf16.mxu0 0
  %320 = vmatpush1.bf16.msra.mxu0 %v303
  %321 = vmatprep.subr.bf16.mxu0 0
  %322 = vmatpush2.bf16.msra.mxu0 0
  %323 = vmatprep.subr.bf16.mxu0 0
  %324 = vmatpush2.bf16.msra.mxu0 0
  %325 = vmatprep.subr.bf16.mxu0 0
  %326 = vmatpush2.bf16.msra.mxu0 0
  %327 = vmatprep.subr.bf16.mxu0 0
  %328 = vmatpush2.bf16.msra.mxu0 0
  %329 = vmatprep.subr.bf16.mxu0 0
  %330 = vmatpush2.bf16.msra.mxu0 0
  %331 = vmatprep.subr.bf16.mxu0 0
  %332 = vmatpush2.bf16.msra.mxu0 0
  %333 = vmatprep.subr.bf16.mxu0 0
  %334 = vmatpush2.bf16.msra.mxu0 0
  %335 = vmatprep.subr.bf16.mxu0 0
  %336 = vmatpush2.bf16.msra.mxu0 0
  %337 = vmatprep.mubr.bf16.mxu0 0
  %338 = vmatmul.mubr.bf16.gmra.mxu0 %v263
  %v339 = vpop.f32.mrf.mxu0
  %v340 = vadd.f32 %v76, %v339
  %v341 = vpop.f32.mrf.mxu0
  %v342 = vpop.f32.mrf.mxu0
  %v343 = vadd.f32 %v81, %v342
  %v344 = vpop.f32.mrf.mxu0
  %345 = vmatprep.mubr.bf16.mxu0 0
  %346 = vmatmul.mubr.bf16.gmra.mxu0 %v266
  %v347 = vpop.f32.mrf.mxu0
  %v348 = vadd.f32 %v86, %v347
  %v349 = vpop.f32.mrf.mxu0
  %v350 = vpop.f32.mrf.mxu0
  %v351 = vadd.f32 %v91, %v350
  %v352 = vpop.f32.mrf.mxu0
  %353 = vmatprep.mubr.bf16.mxu0 0
  %354 = vmatmul.mubr.bf16.gmra.mxu0 %v269
  %v355 = vpop.f32.mrf.mxu0
  %v356 = vadd.f32 %v96, %v355
  %v357 = vpop.f32.mrf.mxu0
  %v358 = vpop.f32.mrf.mxu0
  %v359 = vadd.f32 %v101, %v358
  %v360 = vpop.f32.mrf.mxu0
  %361 = vmatprep.mubr.bf16.mxu0 0
  %362 = vmatmul.mubr.bf16.gmra.mxu0 %v272
  %v363 = vpop.f32.mrf.mxu0
  %v364 = vadd.f32 %v106, %v363
  %v365 = vpop.f32.mrf.mxu0
  %v366 = vpop.f32.mrf.mxu0
  %v367 = vadd.f32 %v111, %v366
  %v368 = vpop.f32.mrf.mxu0
  %369 = vmatprep.mubr.bf16.mxu0 0
  %370 = vmatmul.mubr.bf16.gmra.mxu0 %v275
  %v371 = vpop.f32.mrf.mxu0
  %v372 = vadd.f32 %v116, %v371
  %v373 = vpop.f32.mrf.mxu0
  %v374 = vpop.f32.mrf.mxu0
  %v375 = vadd.f32 %v121, %v374
  %v376 = vpop.f32.mrf.mxu0
  %377 = vmatprep.mubr.bf16.mxu0 0
  %378 = vmatmul.mubr.bf16.gmra.mxu0 %v278
  %v379 = vpop.f32.mrf.mxu0
  %v380 = vadd.f32 %v126, %v379
  %v381 = vpop.f32.mrf.mxu0
  %v382 = vpop.f32.mrf.mxu0
  %v383 = vadd.f32 %v131, %v382
  %v384 = vpop.f32.mrf.mxu0
  %385 = vmatprep.mubr.bf16.mxu0 0
  %386 = vmatmul.mubr.bf16.gmra.mxu0 %v281
  %v387 = vpop.f32.mrf.mxu0
  %v388 = vadd.f32 %v136, %v387
  %v389 = vpop.f32.mrf.mxu0
  %v390 = vpop.f32.mrf.mxu0
  %v391 = vadd.f32 %v141, %v390
  %v392 = vpop.f32.mrf.mxu0
  %393 = vmatprep.mubr.bf16.mxu0 0
  %394 = vmatmul.mubr.bf16.gmra.mxu0 %v284
  %v395 = vpop.f32.mrf.mxu0
  %v396 = vadd.f32 %v146, %v395
  %v397 = vpop.f32.mrf.mxu0
  %v398 = vpop.f32.mrf.mxu0
  %v399 = vadd.f32 %v151, %v398
  %v400 = vpop.f32.mrf.mxu0
  %401 = vmatprep.mubr.bf16.mxu0 0
  %402 = vmatmul.mubr.bf16.gmra.mxu0 %v287
  %v403 = vpop.f32.mrf.mxu0
  %v404 = vadd.f32 %v156, %v403
  %v405 = vpop.f32.mrf.mxu0
  %v406 = vpop.f32.mrf.mxu0
  %v407 = vadd.f32 %v161, %v406
  %v408 = vpop.f32.mrf.mxu0
  %409 = vmatprep.mubr.bf16.mxu0 0
  %410 = vmatmul.mubr.bf16.gmra.mxu0 %v290
  %v411 = vpop.f32.mrf.mxu0
  %v412 = vadd.f32 %v166, %v411
  %v413 = vpop.f32.mrf.mxu0
  %v414 = vpop.f32.mrf.mxu0
  %v415 = vadd.f32 %v171, %v414
  %v416 = vpop.f32.mrf.mxu0
  %417 = vmatprep.mubr.bf16.mxu0 0
  %418 = vmatmul.mubr.bf16.gmra.mxu0 %v293
  %v419 = vpop.f32.mrf.mxu0
  %v420 = vadd.f32 %v176, %v419
  %v421 = vpop.f32.mrf.mxu0
  %v422 = vpop.f32.mrf.mxu0
  %v423 = vadd.f32 %v181, %v422
  %v424 = vpop.f32.mrf.mxu0
  %425 = vmatprep.mubr.bf16.mxu0 0
  %426 = vmatmul.mubr.bf16.gmra.mxu0 %v296
  %v427 = vpop.f32.mrf.mxu0
  %v428 = vadd.f32 %v186, %v427
  %v429 = vpop.f32.mrf.mxu0
  %v430 = vpop.f32.mrf.mxu0
  %v431 = vadd.f32 %v191, %v430
  %v432 = vpop.f32.mrf.mxu0
  %433 = vmatprep.mubr.bf16.mxu0 0
  %434 = vmatmul.mubr.bf16.gmra.mxu0 %v299
  %v435 = vpop.f32.mrf.mxu0
  %v436 = vadd.f32 %v196, %v435
  %v437 = vpop.f32.mrf.mxu0
  %v438 = vpop.f32.mrf.mxu0
  %v439 = vpop.f32.mrf.mxu0
  %440 = vdwg.mxu0
  %v441 = vmax.f32 %v340, 0.0
  %v442 = vmax.f32 %v343, 0.0
  %v443 = vmax.f32 %v348, 0.0
  %v444 = vmax.f32 %v351, 0.0
  %v445 = vmax.f32 %v356, 0.0
  %v446 = vmax.f32 %v359, 0.0
  %v447 = vmax.f32 %v364, 0.0
  %v448 = vmax.f32 %v367, 0.0
  %v449 = vmax.f32 %v372, 0.0
  %v450 = vmax.f32 %v375, 0.0
  %v451 = vmax.f32 %v380, 0.0
  %v452 = vmax.f32 %v383, 0.0
  %v453 = vmax.f32 %v388, 0.0
  %v454 = vmax.f32 %v391, 0.0
  %v455 = vmax.f32 %v396, 0.0
  %v456 = vmax.f32 %v399, 0.0
  %v457 = vmax.f32 %v404, 0.0
  %v458 = vmax.f32 %v407, 0.0
  %v459 = vmax.f32 %v412, 0.0
  %v460 = vmax.f32 %v415, 0.0
  %v461 = vmax.f32 %v420, 0.0
  %v462 = vmax.f32 %v423, 0.0
  %v463 = vmax.f32 %v428, 0.0
  %v464 = vmax.f32 %v431, 0.0
  %v465 = vmax.f32 %v436, 0.0
  %v466 = vld [vmem:[%s3] sm:$0xff]
  %v467 = vld [vmem:[%s3 + $0x8] sm:$0xff]
  %v468 = vld [vmem:[%s3 + $0x10] sm:$0xff]
  %v469 = vld [vmem:[%s3 + $0x18] sm:$0xff]
  %v470 = vld [vmem:[%s3 + $0x20] sm:$0xff]
  %v471 = vld [vmem:[%s3 + $0x28] sm:$0xff]
  %v472 = vld [vmem:[%s3 + $0x30] sm:$0xff]
  %v473 = vld [vmem:[%s3 + $0x38] sm:$0xff]
  %v474 = vld [vmem:[%s3 + $0x40] sm:$0xff]
  %v475 = vld [vmem:[%s3 + $0x48] sm:$0xff]
  %v476 = vld [vmem:[%s3 + $0x50] sm:$0xff]
  %v477 = vld [vmem:[%s3 + $0x58] sm:$0xff]
  %v478 = vld [vmem:[%s3 + $0x60] sm:$0xff]
  %v479 = vld [vmem:[%s3 + $0x68] sm:$0xff]
  %v480 = vld [vmem:[%s3 + $0x70] sm:$0xff]
  %v481 = vld [vmem:[%s3 + $0x78] sm:$0xff]
  %v482 = vld [vmem:[%s3 + $0x80] sm:$0xff]
  %v483 = vld [vmem:[%s3 + $0x88] sm:$0xff]
  %v484 = vld [vmem:[%s3 + $0x90] sm:$0xff]
  %v485 = vld [vmem:[%s3 + $0x98] sm:$0xff]
  %v486 = vld [vmem:[%s3 + $0xa0] sm:$0xff]
  %v487 = vld [vmem:[%s3 + $0xa8] sm:$0xff]
  %v488 = vld [vmem:[%s3 + $0xb0] sm:$0xff]
  %v489 = vld [vmem:[%s3 + $0xb8] sm:$0xff]
  %v490 = vld [vmem:[%s3 + $0xc0] sm:$0xff]
  %492 = vset.pattern.permute.xlu0 0
  %493 = vperm.xlu0 %492, %v466
  %v494 = vpop.permute.xlu0 %493
  %497 = vset.pattern.permute.xlu0 0
  %498 = vperm.xlu0 %497, %v467
  %v499 = vpop.permute.xlu0 %498
  %502 = vset.pattern.permute.xlu0 0
  %503 = vperm.xlu0 %502, %v468
  %v504 = vpop.permute.xlu0 %503
  %507 = vset.pattern.permute.xlu0 0
  %508 = vperm.xlu0 %507, %v469
  %v509 = vpop.permute.xlu0 %508
  %512 = vset.pattern.permute.xlu0 0
  %513 = vperm.xlu0 %512, %v470
  %v514 = vpop.permute.xlu0 %513
  %517 = vset.pattern.permute.xlu0 0
  %518 = vperm.xlu0 %517, %v471
  %v519 = vpop.permute.xlu0 %518
  %522 = vset.pattern.permute.xlu0 0
  %523 = vperm.xlu0 %522, %v472
  %v524 = vpop.permute.xlu0 %523
  %527 = vset.pattern.permute.xlu0 0
  %528 = vperm.xlu0 %527, %v473
  %v529 = vpop.permute.xlu0 %528
  %532 = vset.pattern.permute.xlu0 0
  %533 = vperm.xlu0 %532, %v474
  %v534 = vpop.permute.xlu0 %533
  %537 = vset.pattern.permute.xlu0 0
  %538 = vperm.xlu0 %537, %v475
  %v539 = vpop.permute.xlu0 %538
  %542 = vset.pattern.permute.xlu0 0
  %543 = vperm.xlu0 %542, %v476
  %v544 = vpop.permute.xlu0 %543
  %547 = vset.pattern.permute.xlu0 0
  %548 = vperm.xlu0 %547, %v477
  %v549 = vpop.permute.xlu0 %548
  %552 = vset.pattern.permute.xlu0 0
  %553 = vperm.xlu0 %552, %v478
  %v554 = vpop.permute.xlu0 %553
  %557 = vset.pattern.permute.xlu0 0
  %558 = vperm.xlu0 %557, %v479
  %v559 = vpop.permute.xlu0 %558
  %562 = vset.pattern.permute.xlu0 0
  %563 = vperm.xlu0 %562, %v480
  %v564 = vpop.permute.xlu0 %563
  %567 = vset.pattern.permute.xlu0 0
  %568 = vperm.xlu0 %567, %v481
  %v569 = vpop.permute.xlu0 %568
  %572 = vset.pattern.permute.xlu0 0
  %573 = vperm.xlu0 %572, %v482
  %v574 = vpop.permute.xlu0 %573
  %577 = vset.pattern.permute.xlu0 0
  %578 = vperm.xlu0 %577, %v483
  %v579 = vpop.permute.xlu0 %578
  %582 = vset.pattern.permute.xlu0 0
  %583 = vperm.xlu0 %582, %v484
  %v584 = vpop.permute.xlu0 %583
  %587 = vset.pattern.permute.xlu0 0
  %588 = vperm.xlu0 %587, %v485
  %v589 = vpop.permute.xlu0 %588
  %592 = vset.pattern.permute.xlu0 0
  %593 = vperm.xlu0 %592, %v486
  %v594 = vpop.permute.xlu0 %593
  %597 = vset.pattern.permute.xlu0 0
  %598 = vperm.xlu0 %597, %v487
  %v599 = vpop.permute.xlu0 %598
  %602 = vset.pattern.permute.xlu0 0
  %603 = vperm.xlu0 %602, %v488
  %v604 = vpop.permute.xlu0 %603
  %607 = vset.pattern.permute.xlu0 0
  %608 = vperm.xlu0 %607, %v489
  %v609 = vpop.permute.xlu0 %608
  %612 = vset.pattern.permute.xlu0 0
  %613 = vperm.xlu0 %612, %v490
  %v614 = vpop.permute.xlu0 %613
  %v616 = vmul.f32 %v441, %v494
  %v617 = vmul.f32 %v442, %v499
  %v618 = vmul.f32 %v443, %v504
  %v619 = vmul.f32 %v444, %v509
  %v620 = vmul.f32 %v445, %v514
  %v621 = vmul.f32 %v446, %v519
  %v622 = vmul.f32 %v447, %v524
  %v623 = vmul.f32 %v448, %v529
  %v624 = vmul.f32 %v449, %v534
  %v625 = vmul.f32 %v450, %v539
  %v626 = vmul.f32 %v451, %v544
  %v627 = vmul.f32 %v452, %v549
  %v628 = vmul.f32 %v453, %v554
  %v629 = vmul.f32 %v454, %v559
  %v630 = vmul.f32 %v455, %v564
  %v631 = vmul.f32 %v456, %v569
  %v632 = vmul.f32 %v457, %v574
  %v633 = vmul.f32 %v458, %v579
  %v634 = vmul.f32 %v459, %v584
  %v635 = vmul.f32 %v460, %v589
  %v636 = vmul.f32 %v461, %v594
  %v637 = vmul.f32 %v462, %v599
  %v638 = vmul.f32 %v463, %v604
  %v639 = vmul.f32 %v464, %v609
  %v640 = vmul.f32 %v465, %v614
  %v641 = vadd.f32 %v616, %v617
  %v642 = vadd.f32 %v641, %v618
  %v643 = vadd.f32 %v642, %v619
  %v644 = vadd.f32 %v643, %v620
  %v645 = vadd.f32 %v644, %v621
  %v646 = vadd.f32 %v645, %v622
  %v647 = vadd.f32 %v646, %v623
  %v648 = vadd.f32 %v647, %v624
  %v649 = vadd.f32 %v648, %v625
  %v650 = vadd.f32 %v649, %v626
  %v651 = vadd.f32 %v650, %v627
  %v652 = vadd.f32 %v651, %v628
  %v653 = vadd.f32 %v652, %v629
  %v654 = vadd.f32 %v653, %v630
  %v655 = vadd.f32 %v654, %v631
  %v656 = vadd.f32 %v655, %v632
  %v657 = vadd.f32 %v656, %v633
  %v658 = vadd.f32 %v657, %v634
  %v659 = vadd.f32 %v658, %v635
  %v660 = vadd.f32 %v659, %v636
  %v661 = vadd.f32 %v660, %v637
  %v662 = vadd.f32 %v661, %v638
  %v663 = vadd.f32 %v662, %v639
  %v664 = vadd.f32 %v663, %v640
  %v665 = vrot.slane %v664, 4
  %v666 = vadd.f32 %v664, %v665
  %v667 = vrot.slane %v666, 2
  %v668 = vadd.f32 %v666, %v667
  %v669 = vrot.slane %v668, 1
  %v670 = vadd.f32 %v668, %v669
  %s671 = sld [smem:[#allocation2]]
  %v672 = vstv %s671
  %v673 = vadd.f32 %v670, %v672
  %674 = vst [vmem:[%s5] sm:$0x1] %v673
  // Predicated region
  $region22: #{net_forward.1} parent=0 // pred_check
    _
  $region23: #{net_forward.1} parent=0 // pred_check_branch
    %676 = sbr.rel (0) target = $region25
  $region24: #{net_forward.1} parent=0 // pred_region
    _
  $region25: #{net_forward.1} parent=0 // pred_fallthru
    _
  // Predicated region
  $region26: #{net_forward.1} parent=0 // pred_check
    _
  $region27: #{net_forward.1} parent=0 // pred_check_branch
    %678 = sbr.rel (0) target = $region29
  $region28: #{net_forward.1} parent=0 // pred_region
    _
  $region29: #{net_forward.1} parent=0 // pred_fallthru
    _

</llo_original>
